<compile_context>
chip_gen: v7x
topology: tpu7x:2x2x1
jax: 0.10.0
libtpu: 0.0.40
codegen_flags: <defaults>
</compile_context>

<pallas_src>
import jax
import jax.numpy as jnp
from jax.experimental import pallas as pl
from jax.experimental.pallas import tpu as pltpu


def _disamb_linear_kernel(x_ref, w_ref, b_ref, o_ref):
    # x_ref: (TM, H) VMEM   w_ref: (H, 2) VMEM (resident)
    # b_ref: (1, 2) f32 VMEM (resident)        o_ref: (TM, 2) VMEM
    acc = jax.lax.dot_general(
        x_ref[...], w_ref[...],
        dimension_numbers=(((1,), (0,)), ((), ())),   # x @ w_t on the MXU
        preferred_element_type=jnp.float32,
    )
    o_ref[...] = (acc + b_ref[...]).astype(o_ref.dtype)


def _sublane_multiple(dtype) -> int:
    itemsize = jnp.dtype(dtype).itemsize
    if itemsize >= 4:
        return 8
    if itemsize == 2:
        return 16
    return 32


_MIB = 1024 * 1024
_DEFAULT_MAX_TILE_M = 2048


def _vmem_plan():
    """(x_double_buffer_budget_bytes, vmem_limit_bytes, is_v7x) per TPU gen."""
    kind = ""
    try:
        kind = jax.devices()[0].device_kind.lower()
    except Exception:  # pragma: no cover - device query is best-effort only
        pass
    is_v7x = ("v7" in kind) or ("tpu7" in kind)
    if is_v7x:
        # 64 MiB physical VMEM per TC: keep the streamed x tile modest.
        return 32 * _MIB, 48 * _MIB, True
    if ("v5" in kind) or ("v6" in kind):
        # 128 MiB physical VMEM: big tiles amortize the ~0.35us/step overhead.
        return 48 * _MIB, 96 * _MIB, False
    # Unknown generation: conservative.
    return 32 * _MIB, 48 * _MIB, False


def disambiguation_head(x, weight, bias, *, tile_m=None):
    """y = x @ weight.T + bias  (PyTorch nn.Linear(hidden_dim, 2) semantics).

    x:      (..., hidden_dim)
    weight: (2, hidden_dim)   -- PyTorch Linear weight layout
    bias:   (2,)
    returns (..., 2)
    """
    orig_shape = x.shape
    hidden = orig_shape[-1]
    x2d = x.reshape(-1, hidden)
    m = x2d.shape[0]

    dtype = x.dtype
    itemsize = jnp.dtype(dtype).itemsize
    sub = _sublane_multiple(dtype)

    x_budget, vmem_limit, is_v7x = _vmem_plan()

    if tile_m is None:
        # Rows per tile so the double-buffered x tile stays within budget.
        budget_rows = max(sub, x_budget // (2 * hidden * itemsize))
        tile_m = min(_DEFAULT_MAX_TILE_M, budget_rows)
    tile_m = max(sub, (tile_m // sub) * sub)

    if tile_m >= m:
        # Whole input is one resident block; block == full array dims is
        # always layout-legal and there are no out-of-bounds rows.
        tile_m = m
        num_tiles = 1
    else:
        # Ragged tail: no jnp.pad.  The last block may be partially OOB;
        # Pallas masks the OOB output rows and the garbage input rows only
        # feed those masked rows (compute is row-independent).
        num_tiles = pl.cdiv(m, tile_m)

    # One-time tiny copies outside the kernel: (H, 2) MXU-friendly weight in
    # the activation dtype, and a (1, 2) f32 bias row.
    w_t = weight.T.astype(dtype)                 # (hidden, 2)
    b2 = bias.reshape(1, 2).astype(jnp.float32)  # (1, 2)

    cost = pl.CostEstimate(
        flops=4 * m * hidden,                    # 2*M*H MACs * 2 outputs
        transcendentals=0,
        bytes_accessed=(m * hidden * itemsize    # stream x
                        + 2 * hidden * itemsize  # resident weight
                        + m * 2 * itemsize),     # output
    )

    if is_v7x and num_tiles >= 2 and num_tiles % 2 == 0:
        # Shard row tiles across both v7x TensorCores (each has its own HBM
        # path); plain "parallel" does not change codegen.
        dim_sem = (pltpu.CORE_PARALLEL,)
    else:
        dim_sem = ("parallel",)

    out = pl.pallas_call(
        _disamb_linear_kernel,
        out_shape=jax.ShapeDtypeStruct((m, 2), dtype),
        grid_spec=pl.GridSpec(
            grid=(num_tiles,),
            in_specs=[
                pl.BlockSpec((tile_m, hidden), lambda i: (i, 0)),
                pl.BlockSpec((hidden, 2), lambda i: (0, 0)),   # resident weight
                pl.BlockSpec((1, 2), lambda i: (0, 0)),        # resident bias
            ],
            out_specs=pl.BlockSpec((tile_m, 2), lambda i: (i, 0)),
        ),
        compiler_params=pltpu.CompilerParams(
            dimension_semantics=dim_sem,
            vmem_limit_bytes=vmem_limit,
        ),
        cost_estimate=cost,
    )(x2d, w_t, b2)

    return out.reshape(*orig_shape[:-1], 2)


if __name__ == "__main__":
    # Deterministic parameter init (synthetic, matching nn.Linear(hidden, 2)).
    batch, seq, hidden = 2, 8, 32
    key = jax.random.PRNGKey(0)
    kx, kw, kb, kx2, kx3 = jax.random.split(key, 5)

    x = jax.random.normal(kx, (batch, seq, hidden), dtype=jnp.float32)
    # PyTorch Linear weight shape: (out_features=2, in_features=hidden)
    bound = 1.0 / (hidden ** 0.5)
    weight = jax.random.uniform(kw, (2, hidden), dtype=jnp.float32,
                                minval=-bound, maxval=bound)
    bias = jax.random.uniform(kb, (2,), dtype=jnp.float32,
                              minval=-bound, maxval=bound)

    y = jax.block_until_ready(disambiguation_head(x, weight, bias))
    y_ref = x @ weight.T + bias
    assert y.shape == (batch, seq, 2)
    assert jnp.allclose(y, y_ref, atol=1e-5, rtol=1e-5)

    # Ragged row count that fits in a single full-array block (no OOB).
    x_rag = jax.random.normal(kx2, (3, 5, hidden), dtype=jnp.float32)
    y_rag = jax.block_until_ready(disambiguation_head(x_rag, weight, bias))
    y_rag_ref = x_rag @ weight.T + bias
    assert y_rag.shape == (3, 5, 2)
    assert jnp.allclose(y_rag, y_rag_ref, atol=1e-5, rtol=1e-5)

    # Multi-tile ragged path with a partially out-of-bounds last block
    # (no jnp.pad): 40 rows, tile_m=16 -> 3 tiles, last tile 8 valid rows.
    x_oob = jax.random.normal(kx3, (40, hidden), dtype=jnp.float32)
    y_oob = jax.block_until_ready(
        disambiguation_head(x_oob, weight, bias, tile_m=16))
    y_oob_ref = x_oob @ weight.T + bias
    assert y_oob.shape == (40, 2)
    assert jnp.allclose(y_oob, y_oob_ref, atol=1e-5, rtol=1e-5)

    print("KERNEL_OK")
</pallas_src>

<mosaic_0001>
module attributes {stable_mosaic.version = 11 : i64} {
  func.func @_disamb_linear_kernel(%arg0: i32, %arg1: memref<16x32xf32, #tpu.memory_space<vmem>>, %arg2: memref<32x2xf32, #tpu.memory_space<vmem>>, %arg3: memref<1x2xf32, #tpu.memory_space<vmem>>, %arg4: memref<16x2xf32, #tpu.memory_space<vmem>>) attributes {dimension_semantics = [#tpu.dimension_semantics<parallel>], iteration_bounds = array<i64: 1>, scalar_prefetch = 0 : i64, scratch_operands = 0 : i64, tpu.core_type = #tpu.core_type<tc>, window_params = [{transform_indices = @transform_0, window_bounds = array<i64: 16, 32>}, {pipeline_mode = #tpu.pipeline_mode<synchronous>, transform_indices = @transform_1, window_bounds = array<i64: 32, 2>}, {pipeline_mode = #tpu.pipeline_mode<synchronous>, transform_indices = @transform_2, window_bounds = array<i64: 1, 2>}, {transform_indices = @transform_3, window_bounds = array<i64: 16, 2>}]} {
    %c0 = arith.constant 0 : index
    %c0_0 = arith.constant 0 : index
    %0 = vector.load %arg1[%c0, %c0_0] : memref<16x32xf32, #tpu.memory_space<vmem>>, vector<16x32xf32>
    %c0_1 = arith.constant 0 : index
    %c0_2 = arith.constant 0 : index
    %1 = vector.load %arg2[%c0_1, %c0_2] : memref<32x2xf32, #tpu.memory_space<vmem>>, vector<32x2xf32>
    %cst = arith.constant dense<0.000000e+00> : vector<16x2xf32>
    %2 = tpu.matmul %0, %1, %cst {dimension_numbers = #tpu.dot_dimension_numbers<[1], [0], [0], [1], [0, 0, 1, 1], [], []>} : vector<16x32xf32>, vector<32x2xf32>, vector<16x2xf32> -> vector<16x2xf32>
    %c0_3 = arith.constant 0 : index
    %c0_4 = arith.constant 0 : index
    %3 = vector.load %arg3[%c0_3, %c0_4] : memref<1x2xf32, #tpu.memory_space<vmem>>, vector<1x2xf32>
    %4 = vector.broadcast %3 : vector<1x2xf32> to vector<16x2xf32>
    %5 = arith.addf %2, %4 : vector<16x2xf32>
    %c0_5 = arith.constant 0 : index
    %c0_6 = arith.constant 0 : index
    %6 = vector.load %arg4[%c0_5, %c0_6] : memref<16x2xf32, #tpu.memory_space<vmem>>, vector<16x2xf32>
    tpu.vector_store %arg4[%c0_5, %c0_6], %5 {strides = array<i32>} : memref<16x2xf32, #tpu.memory_space<vmem>>, vector<16x2xf32>,
    return
  }
  func.func @transform_0(%arg0: i32) -> (i32, i32) {
    %c0_i32 = arith.constant 0 : i32
    %c0_i32_0 = arith.constant 0 : i32
    return %arg0, %c0_i32 : i32, i32
  }
  func.func @transform_1(%arg0: i32) -> (i32, i32) {
    %c0_i32 = arith.constant 0 : i32
    %c0_i32_0 = arith.constant 0 : i32
    %c0_i32_1 = arith.constant 0 : i32
    return %c0_i32, %c0_i32_0 : i32, i32
  }
  func.func @transform_2(%arg0: i32) -> (i32, i32) {
    %c0_i32 = arith.constant 0 : i32
    %c0_i32_0 = arith.constant 0 : i32
    %c0_i32_1 = arith.constant 0 : i32
    return %c0_i32, %c0_i32_0 : i32, i32
  }
  func.func @transform_3(%arg0: i32) -> (i32, i32) {
    %c0_i32 = arith.constant 0 : i32
    %c0_i32_0 = arith.constant 0 : i32
    return %arg0, %c0_i32 : i32, i32
  }
}

</mosaic_0001>

<llo_original>
// kernel: tpu_custom_call.1
$region0: #{tpu_custom_call.1}
  #allocation0 [shape = 'u32[]', space=smem, size = 0x4, offset = 0x4, fixed_abs, tag = 'smem constant byte address 0x4 - core index']
  #allocation1 [shape = 'u32[144,128]{1,0:T(1,128)}', space=vmem, size = 0x12000, scoped, tag = 'internal scratch']
  %s0 = inlined_call_operand.vmem [shape: f32[16,32], index: 0, kind: input, shape index: {}]
  %s1 = inlined_call_operand.vmem [shape: f32[32,2], index: 1, kind: input, shape index: {}]
  %s2 = inlined_call_operand.vmem [shape: f32[1,2], index: 2, kind: input, shape index: {}]
  %s3 = inlined_call_operand.vmem [shape: f32[16,2], index: 3, kind: output, shape index: {}]
  %s4 = sld [smem:[#allocation0]]
  $region22: #{tpu_custom_call.1} parent=0
    _
  %s6 = ssub.s32 1, %s4
  %s7 = scalar_select 0, %s6, %s4
  // Predicated region
  $region2: #{tpu_custom_call.1} parent=0 // pred_check
    _
  $region3: #{tpu_custom_call.1} parent=0 // pred_check_branch
    %9 = sbr.rel (0) target = $region5
  $region4: #{tpu_custom_call.1} parent=0 // pred_region
    _
  $region5: #{tpu_custom_call.1} parent=0 // pred_fallthru
    _
  // Predicated region
  $region6: #{tpu_custom_call.1} parent=0 // pred_check
    _
  $region7: #{tpu_custom_call.1} parent=0 // pred_check_branch
    %11 = sbr.rel (0) target = $region9
  $region8: #{tpu_custom_call.1} parent=0 // pred_region
    _
  $region9: #{tpu_custom_call.1} parent=0 // pred_fallthru
    _
  // Predicated region
  $region10: #{tpu_custom_call.1} parent=0 // pred_check
    _
  $region11: #{tpu_custom_call.1} parent=0 // pred_check_branch
    %13 = sbr.rel (0) target = $region13
  $region12: #{tpu_custom_call.1} parent=0 // pred_region
    _
  $region13: #{tpu_custom_call.1} parent=0 // pred_fallthru
    _
  %v14 = vld [vmem:[%s0] sm:$0xff]
  %v15 = vld [vmem:[%s0 + $0x8] sm:$0xff]
  %v16 = vld [vmem:[%s1] sm:$0xff]
  %v17 = vld [vmem:[%s1 + $0x8] sm:$0xff]
  %v18 = vld [vmem:[%s1 + $0x10] sm:$0xff]
  %v19 = vld [vmem:[%s1 + $0x18] sm:$0xff]
  %v20 = vld [vmem:[%s2] sm:$0x1]
  %v22 = vlaneseq
  %v23 = vshrl.u32 %v22, 7
  %v24 = vsub.s32 0, %v23
  %v25 = vrot.slane %v20, %v24
  %vm27 = vcmask 261120
  %v29 = vsel %vm27, %v14, 0
  %v32 = vsel %vm27, %v15, 0
  %34 = vmatprep.subr.mxu0 0.0
  %35 = vmatpush1.msra.mxu0 %v16
  %36 = vmatprep.subr.mxu0 0.0
  %37 = vmatpush1.msra.mxu0 %v17
  %38 = vmatprep.subr.mxu0 0.0
  %39 = vmatpush1.msra.mxu0 %v18
  %40 = vmatprep.subr.mxu0 0.0
  %41 = vmatpush1.msra.mxu0 %v19
  %42 = vmatprep.subr.mxu0 0.0
  %43 = vmatpush1.msra.mxu0 0.0
  %44 = vmatprep.subr.mxu0 0.0
  %45 = vmatpush1.msra.mxu0 0.0
  %46 = vmatprep.subr.mxu0 0.0
  %47 = vmatpush1.msra.mxu0 0.0
  %48 = vmatprep.subr.mxu0 0.0
  %49 = vmatpush1.msra.mxu0 0.0
  %50 = vmatprep.subr.mxu0 0.0
  %51 = vmatpush1.msra.mxu0 0.0
  %52 = vmatprep.subr.mxu0 0.0
  %53 = vmatpush1.msra.mxu0 0.0
  %54 = vmatprep.subr.mxu0 0.0
  %55 = vmatpush1.msra.mxu0 0.0
  %56 = vmatprep.subr.mxu0 0.0
  %57 = vmatpush1.msra.mxu0 0.0
  %58 = vmatprep.subr.mxu0 0.0
  %59 = vmatpush1.msra.mxu0 0.0
  %60 = vmatprep.subr.mxu0 0.0
  %61 = vmatpush1.msra.mxu0 0.0
  %62 = vmatprep.subr.mxu0 0.0
  %63 = vmatpush1.msra.mxu0 0.0
  %64 = vmatprep.subr.mxu0 0.0
  %65 = vmatpush1.msra.mxu0 0.0
  %66 = vmatprep.subr.mxu0 0.0
  %67 = vmatpush1.msra.mxu0 0.0
  %68 = vmatprep.subr.mxu0 0.0
  %69 = vmatpush1.msra.mxu0 0.0
  %70 = vmatprep.subr.mxu0 0.0
  %71 = vmatpush1.msra.mxu0 0.0
  %72 = vmatprep.subr.mxu0 0.0
  %73 = vmatpush1.msra.mxu0 0.0
  %74 = vmatprep.subr.mxu0 0.0
  %75 = vmatpush1.msra.mxu0 0.0
  %76 = vmatprep.subr.mxu0 0.0
  %77 = vmatpush1.msra.mxu0 0.0
  %78 = vmatprep.subr.mxu0 0.0
  %79 = vmatpush1.msra.mxu0 0.0
  %80 = vmatprep.subr.mxu0 0.0
  %81 = vmatpush1.msra.mxu0 0.0
  %82 = vmatprep.subr.mxu0 0.0
  %83 = vmatpush1.msra.mxu0 0.0
  %84 = vmatprep.subr.mxu0 0.0
  %85 = vmatpush1.msra.mxu0 0.0
  %86 = vmatprep.subr.mxu0 0.0
  %87 = vmatpush1.msra.mxu0 0.0
  %88 = vmatprep.subr.mxu0 0.0
  %89 = vmatpush1.msra.mxu0 0.0
  %90 = vmatprep.subr.mxu0 0.0
  %91 = vmatpush1.msra.mxu0 0.0
  %92 = vmatprep.subr.mxu0 0.0
  %93 = vmatpush1.msra.mxu0 0.0
  %94 = vmatprep.subr.mxu0 0.0
  %95 = vmatpush1.msra.mxu0 0.0
  %96 = vmatprep.subr.mxu0 0.0
  %97 = vmatpush1.msra.mxu0 0.0
  %98 = vmatprep.mubr.f32.mxu0 0.0
  %99 = vmatmul.mubr.f32.gmra.mrb[0].mxu0 %v29
  %v100 = vpop.f32.mrb[0].mxu0
  %v101 = vadd.f32 %v25, %v100
  %v102 = vpop.f32.mrb[0].mxu0
  %103 = vmatprep.mubr.f32.mxu0 0.0
  %104 = vmatmul.mubr.f32.gmra.mrb[0].mxu0 %v32
  %v105 = vpop.f32.mrb[0].mxu0
  %v106 = vadd.f32 %v25, %v105
  %v107 = vpop.f32.mrb[0].mxu0
  %108 = vdwg.mxu0
  %vm109 = vcmask 15360
  %110 = vst.msk [vmem:[%s3] sm:$0xff] %vm109, %v101
  %111 = vst.msk [vmem:[%s3 + $0x8] sm:$0xff] %vm109, %v106
  // Predicated region
  $region14: #{tpu_custom_call.1} parent=0 // pred_check
    _
  $region15: #{tpu_custom_call.1} parent=0 // pred_check_branch
    %113 = sbr.rel (0) target = $region17
  $region16: #{tpu_custom_call.1} parent=0 // pred_region
    _
  $region17: #{tpu_custom_call.1} parent=0 // pred_fallthru
    _
  // Predicated region
  $region18: #{tpu_custom_call.1} parent=0 // pred_check
    _
  $region19: #{tpu_custom_call.1} parent=0 // pred_check_branch
    %115 = sbr.rel (0) target = $region21
  $region20: #{tpu_custom_call.1} parent=0 // pred_region
    _
  $region21: #{tpu_custom_call.1} parent=0 // pred_fallthru
    _

</llo_original>
